<compile_context>
chip_gen: v7x
topology: tpu7x:2x2x1
jax: 0.10.0
libtpu: 0.0.40
codegen_flags: <defaults>
</compile_context>

<pallas_src>
import math
import functools

import jax
import jax.numpy as jnp
from jax.experimental import pallas as pl
from jax.experimental.pallas import tpu as pltpu


# --------------------------------------------------------------------------------------
# Pallas kernel: per (batch, head, q-tile) scores + tril mask + scale
# --------------------------------------------------------------------------------------
def _scores_kernel(q_ref, kt_ref, o_ref, *, tq, inv_sqrt_d, mask_value):
    # q_ref:  (1, 1, TQ, D)   rotated query tile for the current (batch, head)
    # kt_ref: (1, 1, D, S)    rotated keys, transposed (lane-dense RHS, loaded once per head)
    # o_ref:  (1, 1, TQ, S)   logits tile
    t = pl.program_id(2)

    q = q_ref[0, 0]                                                     # [TQ, D]
    kt = kt_ref[0, 0]                                                   # [D, S]
    scores = jnp.dot(q, kt, preferred_element_type=jnp.float32)         # [TQ, S]

    start = t * tq
    row = start + jax.lax.broadcasted_iota(jnp.int32, scores.shape, 0)
    col = jax.lax.broadcasted_iota(jnp.int32, scores.shape, 1)
    # (scores - tril*1e12) / sqrt(D)  — same op order as the PyTorch reference
    scores = jnp.where(row > col, scores - mask_value, scores) * inv_sqrt_d
    o_ref[0, 0] = scores.astype(o_ref.dtype)


# --------------------------------------------------------------------------------------
# Helpers
# --------------------------------------------------------------------------------------
def rope_tables(max_len, d):
    """cos_position / sin_position as in RoPEPositionEncoding.__init__ (shape [max_len, d])."""
    pos = jnp.arange(max_len, dtype=jnp.float32)[:, None]                       # [L, 1]
    div = jnp.exp(jnp.arange(0, d, 2, dtype=jnp.float32) * (-math.log(10000.0) / d))
    sin_t = jnp.sin(pos * div)                                                  # [L, d/2]
    cos_t = jnp.cos(pos * div)
    cos_pos = jnp.repeat(cos_t, 2, axis=-1)                                     # repeat_interleave(2)
    sin_pos = jnp.repeat(sin_t, 2, axis=-1)
    return cos_pos, sin_pos


def _round_up(x, m):
    return ((x + m - 1) // m) * m


def _pick_q_tile(s_pad, d, out_itemsize, max_tile=512, budget_bytes=16 << 20):
    """Largest multiple-of-8 divisor of s_pad (<= max_tile) whose double-buffered
    q-tile + k-block + out-tile VMEM footprint (with (8,128) layout padding) fits
    budget_bytes. Returns (tile, vmem_bytes_needed)."""
    d_lane = _round_up(d, 128)          # q tile last dim padded to 128 lanes
    s_lane = _round_up(s_pad, 128)      # k / out last dim padded to 128 lanes
    d_sub = _round_up(d, 8)

    def need(tq):
        q_bytes = 2 * tq * d_lane * 4
        k_bytes = 2 * d_sub * s_lane * 4
        o_bytes = 2 * tq * s_lane * out_itemsize
        return q_bytes + k_bytes + o_bytes

    best = 8
    cap = min(max_tile, s_pad)
    t = 8
    while t <= cap:
        if s_pad % t == 0 and need(t) <= budget_bytes:
            best = t
        t += 8
    return best, need(best)


# --------------------------------------------------------------------------------------
# Forward pass
# --------------------------------------------------------------------------------------
def global_pointer_forward(x, W, b, *, heads, head_size, max_len=512,
                           out_dtype=jnp.float32):
    """x: [B, S, hidden]; W: [hidden, heads*head_size*2]; b: [heads*head_size*2].
    Returns logits [B, heads, S, S] (mask=None, RoPE=True, tril_mask=True path)."""
    B, S, HID = x.shape
    D = head_size
    assert D % 2 == 0
    assert S <= max_len, "sequence length exceeds max_len of the RoPE tables"

    # ---- hoisted projection + RoPE (all heads at once, full-width MXU, pure XLA) ----
    cos_pos, sin_pos = rope_tables(max_len, D)
    seq = x @ W + b                                                     # [B, S, heads*2D]
    seq = seq.reshape(B, S, heads, 2 * D)                               # chunk+stack layout
    qw = seq[..., :D]                                                   # [B, S, H, D]
    kw = seq[..., D:]

    def rope(v):                                                        # v: [B, S, H, D]
        v = jnp.transpose(v, (0, 2, 1, 3))                              # [B, H, S, D]
        v2 = jnp.stack([-v[..., 1::2], v[..., ::2]], axis=-1).reshape(v.shape)
        return v * cos_pos[:S] + v2 * sin_pos[:S]

    q_rot = rope(qw)                                                    # [B, H, S, D]
    k_rot = rope(kw)                                                    # [B, H, S, D]
    k_rot_t = jnp.transpose(k_rot, (0, 1, 3, 2))                        # [B, H, D, S] lane-dense

    # ---- pad S for (8,128)-friendly tiling ----
    S_pad = _round_up(S, 8)
    if S_pad != S:
        q_rot = jnp.pad(q_rot, ((0, 0), (0, 0), (0, S_pad - S), (0, 0)))
        k_rot_t = jnp.pad(k_rot_t, ((0, 0), (0, 0), (0, 0), (0, S_pad - S)))

    out_itemsize = jnp.dtype(out_dtype).itemsize
    TQ, vmem_need = _pick_q_tile(S_pad, D, out_itemsize)
    nq = S_pad // TQ
    vmem_limit = max(vmem_need + (4 << 20), 24 << 20)                   # explicit, gen-safe

    kernel = functools.partial(_scores_kernel,
                               tq=TQ,
                               inv_sqrt_d=1.0 / math.sqrt(D),
                               mask_value=1e12)

    grid = (B, heads, nq)
    out = pl.pallas_call(
        kernel,
        out_shape=jax.ShapeDtypeStruct((B, heads, S_pad, S_pad), out_dtype),
        grid_spec=pltpu.PrefetchScalarGridSpec(
            num_scalar_prefetch=0,
            grid=grid,
            in_specs=[
                pl.BlockSpec((1, 1, TQ, D), lambda bi, hi, ti: (bi, hi, ti, 0)),       # q tile
                pl.BlockSpec((1, 1, D, S_pad), lambda bi, hi, ti: (bi, hi, 0, 0)),     # k^T block
            ],
            out_specs=pl.BlockSpec((1, 1, TQ, S_pad), lambda bi, hi, ti: (bi, hi, ti, 0)),
        ),
        compiler_params=pltpu.CompilerParams(
            dimension_semantics=("parallel", "parallel", "parallel"),
            vmem_limit_bytes=int(vmem_limit)),
    )(q_rot, k_rot_t)

    if S_pad != S:
        out = out[:, :, :S, :S]
    return out


# --------------------------------------------------------------------------------------
# Pure-JAX reference (mirror of the PyTorch forward, mask=None)
# --------------------------------------------------------------------------------------
def global_pointer_reference(x, W, b, *, heads, head_size, max_len=512):
    B, S, HID = x.shape
    seq_out = x @ W + b                                                 # [B, S, heads*2D]
    seq_out = seq_out.reshape(B, S, heads, 2 * head_size)
    qw = seq_out[..., :head_size]                                       # [B, S, H, D]
    kw = seq_out[..., head_size:]

    cos_pos, sin_pos = rope_tables(max_len, head_size)

    def rope(v):
        v = jnp.transpose(v, (0, 2, 1, 3))                              # [B, H, S, D]
        v2 = jnp.stack([-v[..., 1::2], v[..., ::2]], axis=-1).reshape(v.shape)
        return v * cos_pos[:S] + v2 * sin_pos[:S]

    qw = rope(qw)
    kw = rope(kw)
    logits = jnp.einsum('bhmd,bhnd->bhmn', qw, kw)
    tril = jnp.tril(jnp.ones((S, S), dtype=logits.dtype), -1)
    logits = logits - tril * 1e12
    return logits / math.sqrt(head_size)


# --------------------------------------------------------------------------------------
if __name__ == "__main__":
    MAX_LEN = 512
    key = jax.random.PRNGKey(0)

    def make_case(key, B, S, HIDDEN, HEADS, HEAD_SIZE):
        kx, kw, kb = jax.random.split(key, 3)
        x = jax.random.normal(kx, (B, S, HIDDEN), dtype=jnp.float32)
        scale = 1.0 / math.sqrt(HIDDEN)
        W = jax.random.uniform(kw, (HIDDEN, HEADS * HEAD_SIZE * 2),
                               minval=-scale, maxval=scale, dtype=jnp.float32)
        b = jax.random.uniform(kb, (HEADS * HEAD_SIZE * 2,),
                               minval=-scale, maxval=scale, dtype=jnp.float32)
        return x, W, b

    # case 1: module-consistent small shapes
    B, S, HIDDEN, HEADS, HEAD_SIZE = 2, 8, 32, 2, 16
    x, W, b = make_case(key, B, S, HIDDEN, HEADS, HEAD_SIZE)
    fwd = jax.jit(functools.partial(global_pointer_forward,
                                    heads=HEADS, head_size=HEAD_SIZE, max_len=MAX_LEN))
    out = jax.block_until_ready(fwd(x, W, b))
    ref = global_pointer_reference(x, W, b, heads=HEADS, head_size=HEAD_SIZE, max_len=MAX_LEN)
    assert out.shape == (B, HEADS, S, S)
    assert jnp.allclose(out, ref, rtol=1e-4, atol=1e-3), "mismatch vs. pure-JAX reference (case 1)"

    # case 2: exercises the S-padding path (S not a multiple of 8)
    B2, S2, HIDDEN2, HEADS2, HEAD_SIZE2 = 1, 12, 32, 3, 16
    x2, W2, b2 = make_case(jax.random.PRNGKey(1), B2, S2, HIDDEN2, HEADS2, HEAD_SIZE2)
    fwd2 = jax.jit(functools.partial(global_pointer_forward,
                                     heads=HEADS2, head_size=HEAD_SIZE2, max_len=MAX_LEN))
    out2 = jax.block_until_ready(fwd2(x2, W2, b2))
    ref2 = global_pointer_reference(x2, W2, b2, heads=HEADS2, head_size=HEAD_SIZE2, max_len=MAX_LEN)
    assert out2.shape == (B2, HEADS2, S2, S2)
    assert jnp.allclose(out2, ref2, rtol=1e-4, atol=1e-3), "mismatch vs. pure-JAX reference (case 2)"

    print("KERNEL_OK")
</pallas_src>

<mosaic_0001>
module attributes {stable_mosaic.version = 11 : i64} {
  func.func @_scores_kernel(%arg0: i32, %arg1: i32, %arg2: i32, %arg3: memref<1x1x8x16xf32, #tpu.memory_space<vmem>>, %arg4: memref<1x1x16x8xf32, #tpu.memory_space<vmem>>, %arg5: memref<1x1x8x8xf32, #tpu.memory_space<vmem>>) attributes {dimension_semantics = [#tpu.dimension_semantics<parallel>, #tpu.dimension_semantics<parallel>, #tpu.dimension_semantics<parallel>], iteration_bounds = array<i64: 2, 2, 1>, scalar_prefetch = 0 : i64, scratch_operands = 0 : i64, tpu.core_type = #tpu.core_type<tc>, window_params = [{transform_indices = @transform_0, window_bounds = array<i64: 1, 1, 8, 16>}, {transform_indices = @transform_1, window_bounds = array<i64: 1, 1, 16, 8>}, {transform_indices = @transform_2, window_bounds = array<i64: 1, 1, 8, 8>}]} {
    %c0 = arith.constant 0 : index
    %c0_0 = arith.constant 0 : index
    %c0_1 = arith.constant 0 : index
    %c0_2 = arith.constant 0 : index
    %0 = vector.load %arg3[%c0, %c0_0, %c0_1, %c0_2] : memref<1x1x8x16xf32, #tpu.memory_space<vmem>>, vector<1x1x8x16xf32>
    %1 = vector.shape_cast %0 : vector<1x1x8x16xf32> to vector<8x16xf32>
    %c0_3 = arith.constant 0 : index
    %c0_4 = arith.constant 0 : index
    %c0_5 = arith.constant 0 : index
    %c0_6 = arith.constant 0 : index
    %2 = vector.load %arg4[%c0_3, %c0_4, %c0_5, %c0_6] : memref<1x1x16x8xf32, #tpu.memory_space<vmem>>, vector<1x1x16x8xf32>
    %3 = vector.shape_cast %2 : vector<1x1x16x8xf32> to vector<16x8xf32>
    %cst = arith.constant dense<0.000000e+00> : vector<8x8xf32>
    %4 = tpu.matmul %1, %3, %cst {dimension_numbers = #tpu.dot_dimension_numbers<[1], [0], [0], [1], [0, 0, 1, 1], [], []>} : vector<8x16xf32>, vector<16x8xf32>, vector<8x8xf32> -> vector<8x8xf32>
    %c8_i32 = arith.constant 8 : i32
    %5 = arith.muli %arg2, %c8_i32 : i32
    %6 = tpu.iota {dimensions = array<i32: 0>} : vector<8x8xi32>
    %7 = vector.broadcast %5 : i32 to vector<8x8xi32>
    %8 = arith.addi %7, %6 : vector<8x8xi32>
    %9 = tpu.iota {dimensions = array<i32: 1>} : vector<8x8xi32>
    %10 = arith.cmpi sgt, %8, %9 : vector<8x8xi32>
    %cst_7 = arith.constant 9.99999995E+11 : f32
    %11 = vector.broadcast %cst_7 : f32 to vector<8x8xf32>
    %12 = arith.subf %4, %11 : vector<8x8xf32>
    %13 = arith.select %10, %12, %4 : vector<8x8xi1>, vector<8x8xf32>
    %cst_8 = arith.constant 2.500000e-01 : f32
    %14 = vector.broadcast %cst_8 : f32 to vector<8x8xf32>
    %15 = arith.mulf %13, %14 : vector<8x8xf32>
    %c0_9 = arith.constant 0 : index
    %c0_10 = arith.constant 0 : index
    %c0_11 = arith.constant 0 : index
    %c0_12 = arith.constant 0 : index
    %16 = vector.load %arg5[%c0_9, %c0_10, %c0_11, %c0_12] : memref<1x1x8x8xf32, #tpu.memory_space<vmem>>, vector<1x1x8x8xf32>
    %17 = vector.shape_cast %16 : vector<1x1x8x8xf32> to vector<8x8xf32>
    %18 = vector.shape_cast %15 : vector<8x8xf32> to vector<1x1x8x8xf32>
    tpu.vector_store %arg5[%c0_9, %c0_10, %c0_11, %c0_12], %18 {strides = array<i32>} : memref<1x1x8x8xf32, #tpu.memory_space<vmem>>, vector<1x1x8x8xf32>,
    return
  }
  func.func @transform_0(%arg0: i32, %arg1: i32, %arg2: i32) -> (i32, i32, i32, i32) {
    %c0_i32 = arith.constant 0 : i32
    %c0_i32_0 = arith.constant 0 : i32
    return %arg0, %arg1, %arg2, %c0_i32 : i32, i32, i32, i32
  }
  func.func @transform_1(%arg0: i32, %arg1: i32, %arg2: i32) -> (i32, i32, i32, i32) {
    %c0_i32 = arith.constant 0 : i32
    %c0_i32_0 = arith.constant 0 : i32
    %c0_i32_1 = arith.constant 0 : i32
    return %arg0, %arg1, %c0_i32, %c0_i32_0 : i32, i32, i32, i32
  }
  func.func @transform_2(%arg0: i32, %arg1: i32, %arg2: i32) -> (i32, i32, i32, i32) {
    %c0_i32 = arith.constant 0 : i32
    %c0_i32_0 = arith.constant 0 : i32
    return %arg0, %arg1, %arg2, %c0_i32 : i32, i32, i32, i32
  }
}

</mosaic_0001>

<llo_original>
// kernel: global_pointer_forward.1
$region0: #{global_pointer_forward.1}
  #allocation0 [shape = 'u32[]', space=smem, size = 0x4, offset = 0x4, fixed_abs, tag = 'smem constant byte address 0x4 - core index']
  #allocation1 [shape = 'u32[144,128]{1,0:T(1,128)}', space=vmem, size = 0x12000, scoped, tag = 'internal scratch']
  %s0 = inlined_call_operand.vmem [shape: f32[2,2,8,16], index: 0, kind: input, shape index: {}]
  %s1 = inlined_call_operand.vmem [shape: f32[2,2,16,8], index: 1, kind: input, shape index: {}]
  %s2 = inlined_call_operand.hbm [shape: f32[2,2,8,8], index: 2, kind: output, shape index: {}]
  %s3 = sld [smem:[#allocation0]]
  $region41: #{global_pointer_forward.1} parent=0
    _
  %s5 = ssub.s32 1, %s3
  %s6 = scalar_select 0, %s5, %s3
  $region1: #{global_pointer_forward.1} parent=0
    #allocation2 [shape = 'u8[8192]{0}', space=vmem, size = 0x2000, scoped, tag = 'output window, operand 0']
    #allocation3 [shape = 's32[2]{0}', space=sflag, size = 0x8, scoped, tag = 'scoped memory for global_pointer_forward.1']
    %7 = vsyncpa [#allocation3], 0
    %s8 = scalar_lea.sflag [#allocation3], 1
    %9 = vsyncpa %s8, 0
    loop: start=0, step=1, limit=6
    $region2: #{global_pointer_forward.1} parent=1 // loop_pre_header
      _
    $region3: #{global_pointer_forward.1} parent=1 // loop_header
      %s11 = sphi 0, %s15
      %p12 = scmp.ge.s32.totalorder %s11, 6
      %s18 = sphi 0, %s37
      %s19 = sphi 0, %s33
      %s20 = sphi 0, %s29
      %s21 = sphi 0, %s18
      %s22 = sphi 0, %s19
      %s23 = sphi 0, %s20
      %s24 = sphi 0, %s21
      %s25 = sphi 0, %s22
      %s26 = sphi 0, %s23
      %s44 = sphi 0, %s46
      %s47 = sphi 0, %s44
      %s48 = sphi 0, %s47
      %s64 = sphi 0, %s48
      %s72 = sphi 0, %s74
      %s75 = sphi 0, %s72
      %s76 = sphi 0, %s75
      %s92 = sphi 0, %s76
      %s102 = sphi 0, %s104
      %s105 = sphi 0, %s102
      %s106 = sphi 0, %s105
      %s122 = sphi 0, %s106
    $region4: #{global_pointer_forward.1} parent=1 // loop_header_branch
      %14 = sbr.rel (%p12) target = $region8
    $region5: #{global_pointer_forward.1} parent=1 // loop_body
      %s16 = ssub.s32 %s11, 1
      %s17 = ssub.s32 %s11, 2
      %s27 = sadd.s32 1, %s20
      %p28 = scmp.ge.s32.totalorder %s27, 1
      %s29 = scalar_select %p28, 0, %s27
      %s30 = sadd.s32 1, %s19
      %s31 = scalar_select %p28, %s30, %s19
      %p32 = scmp.ge.s32.totalorder %s31, 2
      %s33 = scalar_select %p32, 0, %s31
      %s34 = sadd.s32 1, %s18
      %s35 = scalar_select %p32, %s34, %s18
      %p36 = scmp.ge.s32.totalorder %s35, 2
      %s37 = scalar_select %p36, 0, %s35
      %s38 = ssub.s32 %s18, %s37
      %s39 = ssub.s32 %s19, %s33
      %s40 = sor.u32 %s38, %s39
      %s41 = ssub.s32 %s20, %s29
      %s42 = sor.u32 %s40, %s41
      %p43 = scmp.eq.s32.totalorder %s42, 0
      %s45 = sadd.s32 %s44, 1
      %s46 = scalar_select %p43, %s44, %s45
      %p49 = pneg %p43
      %p50 = scmp.eq.s32.totalorder %s11, 3
      %p51 = por %p49, %p50
      %p52 = scmp.ne.s32.totalorder %s44, %s47
      %p53 = scmp.eq.s32.totalorder %s11, 0
      %p54 = por %p52, %p53
      %p55 = scmp.ne.s32.totalorder %s44, %s47
      %p56 = scmp.eq.s32.totalorder %s16, 3
      %p57 = por %p55, %p56
      %p58 = scmp.ne.s32.totalorder %s47, %s48
      %p59 = scmp.eq.s32.totalorder %s16, 0
      %p60 = por %p58, %p59
      %p61 = scmp.ne.s32.totalorder %s47, %s48
      %p62 = scmp.eq.s32.totalorder %s17, 3
      %p63 = por %p61, %p62
      %p65 = scmp.ne.s32.totalorder %s48, %s64
      %p66 = scmp.eq.s32.totalorder %s17, 0
      %p67 = por %p65, %p66
      %s68 = ssub.s32 %s18, %s37
      %s69 = ssub.s32 %s19, %s33
      %s70 = sor.u32 %s68, %s69
      %p71 = scmp.eq.s32.totalorder %s70, 0
      %s73 = sadd.s32 %s72, 1
      %s74 = scalar_select %p71, %s72, %s73
      %p77 = pneg %p71
      %p78 = scmp.eq.s32.totalorder %s11, 3
      %p79 = por %p77, %p78
      %p80 = scmp.ne.s32.totalorder %s72, %s75
      %p81 = scmp.eq.s32.totalorder %s11, 0
      %p82 = por %p80, %p81
      %p83 = scmp.ne.s32.totalorder %s72, %s75
      %p84 = scmp.eq.s32.totalorder %s16, 3
      %p85 = por %p83, %p84
      %p86 = scmp.ne.s32.totalorder %s75, %s76
      %p87 = scmp.eq.s32.totalorder %s16, 0
      %p88 = por %p86, %p87
      %p89 = scmp.ne.s32.totalorder %s75, %s76
      %p90 = scmp.eq.s32.totalorder %s17, 3
      %p91 = por %p89, %p90
      %p93 = scmp.ne.s32.totalorder %s76, %s92
      %p94 = scmp.eq.s32.totalorder %s17, 0
      %p95 = por %p93, %p94
      %s96 = ssub.s32 %s18, %s37
      %s97 = ssub.s32 %s19, %s33
      %s98 = sor.u32 %s96, %s97
      %s99 = ssub.s32 %s20, %s29
      %s100 = sor.u32 %s98, %s99
      %p101 = scmp.eq.s32.totalorder %s100, 0
      %s103 = sadd.s32 %s102, 1
      %s104 = scalar_select %p101, %s102, %s103
      %p107 = pneg %p101
      %p108 = scmp.eq.s32.totalorder %s11, 3
      %p109 = por %p107, %p108
      %p110 = scmp.ne.s32.totalorder %s102, %s105
      %p111 = scmp.eq.s32.totalorder %s11, 0
      %p112 = por %p110, %p111
      %p113 = scmp.ne.s32.totalorder %s102, %s105
      %p114 = scmp.eq.s32.totalorder %s16, 3
      %p115 = por %p113, %p114
      %p116 = scmp.ne.s32.totalorder %s105, %s106
      %p117 = scmp.eq.s32.totalorder %s16, 0
      %p118 = por %p116, %p117
      %p119 = scmp.ne.s32.totalorder %s105, %s106
      %p120 = scmp.eq.s32.totalorder %s17, 3
      %p121 = por %p119, %p120
      %p123 = scmp.ne.s32.totalorder %s106, %s122
      %p124 = scmp.eq.s32.totalorder %s17, 0
      %p125 = por %p123, %p124
      %p126 = scmp.le.s32.totalorder 1, %s11
      %p127 = scmp.lt.s32.totalorder %s11, 5
      %p128 = pnand %p126, %p127
      %p129 = pneg %p128
      // Predicated region
      $region9: #{global_pointer_forward.1} parent=5 // pred_check
        _
      $region10: #{global_pointer_forward.1} parent=5 // pred_check_branch
        %131 = sbr.rel (%p128) target = $region12
      $region11: #{global_pointer_forward.1} parent=5 // pred_region
        %s132 = ssub.s32 %s11, 1
      $region12: #{global_pointer_forward.1} parent=5 // pred_fallthru
        _
      %p133 = scmp.lt.s32.totalorder %s11, 4
      // Predicated region
      $region13: #{global_pointer_forward.1} parent=5 // pred_check
        %p134 = pneg %p133
      $region14: #{global_pointer_forward.1} parent=5 // pred_check_branch
        %136 = sbr.rel (%p134) target = $region16
      $region15: #{global_pointer_forward.1} parent=5 // pred_region
        // Predicated region
        $region17: #{global_pointer_forward.1} parent=15 // pred_check
          %p137 = pneg %p54
        $region18: #{global_pointer_forward.1} parent=15 // pred_check_branch
          %139 = sbr.rel (%p137) target = $region20
        $region19: #{global_pointer_forward.1} parent=15 // pred_region
          %p140 = scmp.lt.s32.totalorder %s18, 1
          %s141 = scalar_select %p140, %s18, 1
          %p142 = scmp.lt.s32.totalorder %s19, 1
          %s143 = scalar_select %p142, %s19, 1
          %p144 = scmp.lt.s32.totalorder %s20, 0
          %s145 = scalar_select %p144, %s20, 0
          %s146 = sadd.s32 %s145, %s143
          %s147 = smul.addr %s141, 2
          %s148 = sadd.s32 %s146, %s147
          %s149 = smul.addr %s148, 8
          %s150 = scalar_lea.vmem %s0, %s149
        $region20: #{global_pointer_forward.1} parent=15 // pred_fallthru
          _
        // Predicated region
        $region21: #{global_pointer_forward.1} parent=15 // pred_check
          %p151 = pneg %p82
        $region22: #{global_pointer_forward.1} parent=15 // pred_check_branch
          %153 = sbr.rel (%p151) target = $region24
        $region23: #{global_pointer_forward.1} parent=15 // pred_region
          %p154 = scmp.lt.s32.totalorder %s18, 1
          %s155 = scalar_select %p154, %s18, 1
          %p156 = scmp.lt.s32.totalorder %s19, 1
          %s157 = scalar_select %p156, %s19, 1
          %s158 = smul.addr %s157, 2
          %s159 = smul.addr %s155, 4
          %s160 = sadd.s32 %s158, %s159
          %s161 = smul.addr %s160, 8
          %s162 = scalar_lea.vmem %s1, %s161
        $region24: #{global_pointer_forward.1} parent=15 // pred_fallthru
          _
      $region16: #{global_pointer_forward.1} parent=5 // pred_fallthru
        _
      %p163 = scmp.le.s32.totalorder 1, %s11
      %p164 = scmp.lt.s32.totalorder %s11, 5
      %p165 = pnand %p163, %p164
      %p166 = pneg %p165
      // Predicated region
      $region25: #{global_pointer_forward.1} parent=5 // pred_check
        _
      $region26: #{global_pointer_forward.1} parent=5 // pred_check_branch
        %168 = sbr.rel (%p165) target = $region28
      $region27: #{global_pointer_forward.1} parent=5 // pred_region
        %s169 = ssub.s32 %s11, 1
        %p170 = scmp.lt.s32.totalorder %s21, 1
        %s171 = scalar_select %p170, %s21, 1
        %p172 = scmp.lt.s32.totalorder %s22, 1
        %s173 = scalar_select %p172, %s22, 1
        %p174 = scmp.lt.s32.totalorder %s23, 0
        %s175 = scalar_select %p174, %s23, 0
        %s176 = sadd.s32 %s175, %s173
        %s177 = smul.addr %s171, 2
        %s178 = sadd.s32 %s176, %s177
        %s179 = smul.addr %s178, 8
        %s180 = scalar_lea.vmem %s0, %s179
        %p181 = pneg %p60
        %p182 = pneg %p57
        %p183 = scmp.lt.s32.totalorder %s21, 1
        %s184 = scalar_select %p183, %s21, 1
        %p185 = scmp.lt.s32.totalorder %s22, 1
        %s186 = scalar_select %p185, %s22, 1
        %s187 = smul.addr %s186, 2
        %s188 = smul.addr %s184, 4
        %s189 = sadd.s32 %s187, %s188
        %s190 = smul.addr %s189, 8
        %s191 = scalar_lea.vmem %s1, %s190
        %p192 = pneg %p88
        %p193 = pneg %p85
        %p194 = pneg %p118
        %p195 = pneg %p115
        %s196 = sand.u32 %s105, 1
        %s197 = scalar_lea.sflag [#allocation3], %s196
        %s198 = sand.u32 %s105, 1
        %s199 = smul.addr %s198, 8
        %s200 = scalar_lea.vmem [#allocation2], %s199
        %p201 = scmp.lt.s32.totalorder %s21, 1
        %s202 = scalar_select %p201, %s21, 1
        %p203 = scmp.lt.s32.totalorder %s22, 1
        %s204 = scalar_select %p203, %s22, 1
        %p205 = scmp.lt.s32.totalorder %s23, 0
        %s206 = scalar_select %p205, %s23, 0
        %s207 = sadd.s32 %s206, %s204
        %s208 = smul.addr %s202, 2
        %s209 = sadd.s32 %s207, %s208
        %s210 = smul.addr %s209, 8
        %s211 = scalar_lea.vmem %s0, %s210
        %p212 = scmp.lt.s32.totalorder %s21, 1
        %s213 = scalar_select %p212, %s21, 1
        %p214 = scmp.lt.s32.totalorder %s22, 1
        %s215 = scalar_select %p214, %s22, 1
        %s216 = smul.addr %s215, 2
        %s217 = smul.addr %s213, 4
        %s218 = sadd.s32 %s216, %s217
        %s219 = smul.addr %s218, 8
        %s220 = scalar_lea.vmem %s1, %s219
        %v221 = vld [vmem:[%s211] sm:$0xff]
        %v222 = vld [vmem:[%s220] sm:$0xff]
        %v223 = vld [vmem:[%s220 + $0x8] sm:$0xff]
        %vm224 = vcmask 130048
        %v226 = vsel %vm224, %v221, 0
        %228 = vmatprep.subr.mxu0 0.0
        %229 = vmatpush1.msra.mxu0 %v222
        %230 = vmatprep.subr.mxu0 0.0
        %231 = vmatpush1.msra.mxu0 %v223
        %232 = vmatprep.subr.mxu0 0.0
        %233 = vmatpush1.msra.mxu0 0.0
        %234 = vmatprep.subr.mxu0 0.0
        %235 = vmatpush1.msra.mxu0 0.0
        %236 = vmatprep.subr.mxu0 0.0
        %237 = vmatpush1.msra.mxu0 0.0
        %238 = vmatprep.subr.mxu0 0.0
        %239 = vmatpush1.msra.mxu0 0.0
        %240 = vmatprep.subr.mxu0 0.0
        %241 = vmatpush1.msra.mxu0 0.0
        %242 = vmatprep.subr.mxu0 0.0
        %243 = vmatpush1.msra.mxu0 0.0
        %244 = vmatprep.subr.mxu0 0.0
        %245 = vmatpush1.msra.mxu0 0.0
        %246 = vmatprep.subr.mxu0 0.0
        %247 = vmatpush1.msra.mxu0 0.0
        %248 = vmatprep.subr.mxu0 0.0
        %249 = vmatpush1.msra.mxu0 0.0
        %250 = vmatprep.subr.mxu0 0.0
        %251 = vmatpush1.msra.mxu0 0.0
        %252 = vmatprep.subr.mxu0 0.0
        %253 = vmatpush1.msra.mxu0 0.0
        %254 = vmatprep.subr.mxu0 0.0
        %255 = vmatpush1.msra.mxu0 0.0
        %256 = vmatprep.subr.mxu0 0.0
        %257 = vmatpush1.msra.mxu0 0.0
        %258 = vmatprep.subr.mxu0 0.0
        %259 = vmatpush1.msra.mxu0 0.0
        %260 = vmatprep.subr.mxu0 0.0
        %261 = vmatpush1.msra.mxu0 0.0
        %262 = vmatprep.subr.mxu0 0.0
        %263 = vmatpush1.msra.mxu0 0.0
        %264 = vmatprep.subr.mxu0 0.0
        %265 = vmatpush1.msra.mxu0 0.0
        %266 = vmatprep.subr.mxu0 0.0
        %267 = vmatpush1.msra.mxu0 0.0
        %268 = vmatprep.subr.mxu0 0.0
        %269 = vmatpush1.msra.mxu0 0.0
        %270 = vmatprep.subr.mxu0 0.0
        %271 = vmatpush1.msra.mxu0 0.0
        %272 = vmatprep.subr.mxu0 0.0
        %273 = vmatpush1.msra.mxu0 0.0
        %274 = vmatprep.subr.mxu0 0.0
        %275 = vmatpush1.msra.mxu0 0.0
        %276 = vmatprep.subr.mxu0 0.0
        %277 = vmatpush1.msra.mxu0 0.0
        %278 = vmatprep.subr.mxu0 0.0
        %279 = vmatpush1.msra.mxu0 0.0
        %280 = vmatprep.subr.mxu0 0.0
        %281 = vmatpush1.msra.mxu0 0.0
        %282 = vmatprep.subr.mxu0 0.0
        %283 = vmatpush1.msra.mxu0 0.0
        %284 = vmatprep.subr.mxu0 0.0
        %285 = vmatpush1.msra.mxu0 0.0
        %286 = vmatprep.subr.mxu0 0.0
        %287 = vmatpush1.msra.mxu0 0.0
        %288 = vmatprep.subr.mxu0 0.0
        %289 = vmatpush1.msra.mxu0 0.0
        %290 = vmatprep.subr.mxu0 0.0
        %291 = vmatpush1.msra.mxu0 0.0
        %292 = vmatprep.mubr.f32.mxu0 0.0
        %293 = vmatmul.mubr.f32.gmra.mrb[0].mxu0 %v226
        %v294 = vpop.f32.mrb[0].mxu0
        %v295 = vadd.f32 0.0, %v294
        %v296 = vpop.f32.mrb[0].mxu0
        %297 = vdwg.mxu0
        %s298 = smul.u32 %s23, 8
        %v299 = vlaneseq
        %v300 = vshrl.u32 %v299, 7
        %v301 = vstv %s298
        %v302 = vadd.s32 %v301, %v300
        %v303 = vlaneseq
        %v304 = vand.u32 %v303, 127
        %vm305 = vcmp.gt.s32.totalorder %v302, %v304
        %v306 = vsub.f32 %v295, 1e+12
        %v307 = vsel %vm305, %v306, %v295
        %v308 = vmul.f32 %v307, 0.25
        %vm309 = vcmask 64512
        %310 = vst.msk [vmem:[%s200] sm:$0xff] %vm309, %v308
        %s311 = sand.u32 %s105, 1
        %s312 = scalar_lea.sflag [#allocation3], %s311
        %s313 = sand.u32 %s105, 1
        %s314 = smul.addr %s313, 8
        %s315 = scalar_lea.vmem [#allocation2], %s314
        // Predicated region
        $region29: #{global_pointer_forward.1} parent=27 // pred_check
          %p316 = pneg %p115
        $region30: #{global_pointer_forward.1} parent=27 // pred_check_branch
          %318 = sbr.rel (%p316) target = $region32
        $region31: #{global_pointer_forward.1} parent=27 // pred_region
          %s320 = ssub.s32 128, 128
          %321 = vsyncadd %s312, %s320
          %s322 = sadd.s32 %s23, %s22
          %s323 = smul.addr %s21, 2
          %s324 = sadd.s32 %s322, %s323
          %s325 = smul.addr %s324, 128
          %s326 = scalar_lea.hbm %s2, %s325
          %s328 = sshll.u32 %s315, 4
          %s329 = int_to_ptr.vmem [resolvable:$true] %s328
          %331 = dma.vmem_to_hbm [thread:$0]  %s329, 128, %s326, %s312
        $region32: #{global_pointer_forward.1} parent=27 // pred_fallthru
          _
      $region28: #{global_pointer_forward.1} parent=5 // pred_fallthru
        _
      %p332 = scmp.le.s32.totalorder 2, %s11
      // Predicated region
      $region33: #{global_pointer_forward.1} parent=5 // pred_check
        %p333 = pneg %p332
      $region34: #{global_pointer_forward.1} parent=5 // pred_check_branch
        %335 = sbr.rel (%p333) target = $region36
      $region35: #{global_pointer_forward.1} parent=5 // pred_region
        %s336 = ssub.s32 %s11, 2
        // Predicated region
        $region37: #{global_pointer_forward.1} parent=35 // pred_check
          %p337 = pneg %p121
        $region38: #{global_pointer_forward.1} parent=35 // pred_check_branch
          %339 = sbr.rel (%p337) target = $region40
        $region39: #{global_pointer_forward.1} parent=35 // pred_region
          %s340 = sand.u32 %s106, 1
          %s341 = scalar_lea.sflag [#allocation3], %s340
          %s342 = sand.u32 %s106, 1
          %s343 = smul.addr %s342, 8
          %s344 = scalar_lea.vmem [#allocation2], %s343
          %345 = dma.done %s341, 128
        $region40: #{global_pointer_forward.1} parent=35 // pred_fallthru
          _
      $region36: #{global_pointer_forward.1} parent=5 // pred_fallthru
        _
    $region6: #{global_pointer_forward.1} parent=1 // loop_footer
      %s15 = sadd.s32 1, %s11
    $region7: #{global_pointer_forward.1} parent=1 // loop_footer_branch
      %10 = sbr.rel target = $region3
    $region8: #{global_pointer_forward.1} parent=1 // loop_exit
      _
    %346 = vsyncpa [#allocation3], 1
    %s347 = scalar_lea.sflag [#allocation3], 1
    %348 = vsyncpa %s347, 1

</llo_original>
